<compile_context>
chip_gen: v5e
topology: v5e:2x2
jax: 0.10.0
libtpu: 0.0.40
codegen_flags: <defaults>
</compile_context>

<pallas_src>
import functools

import jax
import jax.numpy as jnp
from jax.experimental import pallas as pl
from jax.experimental.pallas import tpu as pltpu

BN_EPS = 1e-5
LANE = 128


def _round_up(x, m):
    return ((x + m - 1) // m) * m


def _cdiv(a, b):
    return (a + b - 1) // b


# --------------------------------------------------------------------------
# Kernel A: streamed spatial sum  (grid = (C blocks [parallel], S tiles [red.]))
# --------------------------------------------------------------------------
def _pool_sum_kernel(x_ref, out_ref, acc_ref, *, s_tile, seq_len, inv_s,
                     need_mask, n_chunks):
    """x_ref  : (B, c_tile, s_tile)  one spatial tile of one C block
    out_ref: (B, c_tile)           pooled mean for this C block (last step only)
    acc_ref: (B, c_tile, LANE)     per-lane partial sums (pure VPU adds)
    """
    si = pl.program_id(1)

    @pl.when(si == 0)
    def _init():
        acc_ref[...] = jnp.zeros_like(acc_ref)

    tile_base = si * s_tile
    lane_iota = (jax.lax.broadcasted_iota(jnp.int32, (1, 1, LANE), 2)
                 if need_mask else None)

    def _add_chunk(chunk, lane_start):
        chunk = chunk.astype(jnp.float32)
        if need_mask:
            pos = lane_start + lane_iota
            chunk = jnp.where(pos < seq_len, chunk, 0.0)
        acc_ref[...] += chunk                      # elementwise -> VPU

    if n_chunks <= 16:
        # Short, fully static inner loop (best LLO scheduling visibility).
        for j in range(n_chunks):
            _add_chunk(x_ref[:, :, j * LANE:(j + 1) * LANE],
                       tile_base + j * LANE)
    else:
        @pl.loop(0, n_chunks)
        def _chunk_loop(j):
            start = pl.multiple_of(j * LANE, LANE)
            _add_chunk(x_ref[:, :, pl.ds(start, LANE)], tile_base + start)

    @pl.when(si == pl.num_programs(1) - 1)
    def _finish():
        # Single cross-lane reduce per C block (XLU), then scale to the mean.
        out_ref[...] = jnp.sum(acc_ref[...], axis=-1) * inv_s


# --------------------------------------------------------------------------
# Kernel B: tiny epilogue (fc1 -> BN -> ReLU -> fused heads -> L1 norm -> blend)
# --------------------------------------------------------------------------
def _epilogue_kernel(pooled_ref, w1_ref, gb_ref, wh_ref, btb_ref, m_ref,
                     temp_ref, out_ref, *, n_c, kw_pad):
    """pooled_ref: (n_c, B, c_tile)    pooled means, one slab per C block
    w1_ref    : (n_c, c_tile, hidden)  fc1 weight (transposed, C-blocked)
    gb_ref    : (2, hidden)            row 0 = gamma, row 1 = beta
    wh_ref    : (hidden, KH)           fused [spatial | fourier] head weight
    btb_ref   : (2, KH)                row 0 = fused bias, row 1 = temp_bias
    m_ref     : (kw_pad, kw_pad)       block-diagonal mixture membership G@G^T
    temp_ref  : (1,) SMEM              temperature scalar
    out_ref   : (B, KH)                [blended attention | fourier head]
    """
    # fc1 (bias-free because norm_layer is BatchNorm1d), summed over C blocks.
    h = jnp.dot(pooled_ref[0], w1_ref[0], preferred_element_type=jnp.float32)
    for ci in range(1, n_c):
        h = h + jnp.dot(pooled_ref[ci], w1_ref[ci],
                        preferred_element_type=jnp.float32)

    # BatchNorm1d, training mode: batch statistics, biased variance.
    mu = jnp.mean(h, axis=0, keepdims=True)
    var = jnp.mean((h - mu) ** 2, axis=0, keepdims=True)
    h = (h - mu) * jax.lax.rsqrt(var + BN_EPS)
    h = h * gb_ref[0:1, :] + gb_ref[1:2, :]
    h = jnp.maximum(h, 0.0)                                    # ReLU

    # Single fused head matmul: [spatial | fourier], lane padded to KH.
    heads = (jnp.dot(h, wh_ref[...], preferred_element_type=jnp.float32)
             + btb_ref[0:1, :])                                # (B, KH)

    s_part = heads[:, :kw_pad]                                 # (B, kw_pad)

    # Per-mixture L1 normalization: |s| @ (G G^T) gives every column its
    # mixture's L1 sum (padded columns are zero and stay zero).
    denom = jnp.dot(jnp.abs(s_part), m_ref[...],
                    preferred_element_type=jnp.float32)
    sn = s_part * pl.reciprocal(denom + 0.001, approx=False)

    # Temperature blend (scalar from SMEM — no recompile on schedule change).
    t = temp_ref[0]
    out_ref[:, :kw_pad] = (1.0 - t) * sn + t * btb_ref[1:2, :kw_pad]
    out_ref[:, kw_pad:] = heads[:, kw_pad:]


# --------------------------------------------------------------------------
# Wrapper
# --------------------------------------------------------------------------
def attention_forward(x, params, *, num_local_mixture, kw_planes_per_mixture,
                      temp_value=0.0, s_tile=None, c_split=None):
    """x: (B, C, H, W) float32 or bfloat16.  Returns (attn, fourier)."""
    B, C, H, W = x.shape
    S = H * W
    x3 = x.reshape(B, C, S)                 # metadata-only; x is never padded
    itemsize = x.dtype.itemsize

    w1_t = params["w1_t"]                   # (C, hidden)
    gamma = params["gamma"]                 # (1, hidden)
    beta = params["beta"]                   # (1, hidden)
    wf_t = params["wf_t"]                   # (hidden, kw_planes_fourier)
    bf = params["bf"]                       # (1, kw_planes_fourier)
    ws_t = params["ws_t"]                   # (hidden, kw_planes)
    bs = params["bs"]                       # (1, kw_planes)
    temp_bias = params["temp_bias"]         # (1, kw_planes)

    hidden = w1_t.shape[1]
    L, P = num_local_mixture, kw_planes_per_mixture
    KW = L * P
    KF = wf_t.shape[1]
    KW_pad = _round_up(KW, LANE)
    KF_pad = _round_up(KF, LANE)
    KH = KW_pad + KF_pad

    # ---- generation-aware VMEM budget ----
    try:
        vmem_cap = int(pltpu.get_tpu_info().vmem_capacity_bytes)
    except Exception:
        vmem_cap = 64 * 1024 * 1024                    # conservative fallback
    if vmem_cap >= 100 * 1024 * 1024:                  # v5e / v6e (128 MiB VMEM)
        per_buf_cap = 16 * 1024 * 1024
        vmem_limit = 64 * 1024 * 1024
    else:                                              # v7x (64 MiB) / unknown
        per_buf_cap = 6 * 1024 * 1024
        vmem_limit = 32 * 1024 * 1024

    # ---- C split: >=2 blocks feeds both v7x TensorCores via the "parallel"
    # grid axis, and guards the per-buffer budget even at the 128-lane floor.
    # Sublane granularity is dtype-aware (8 rows f32, 16 rows bf16).
    min_sublane = max(1, (8 * 4) // itemsize)
    valid_splits = [d for d in range(1, C + 1)
                    if C % d == 0 and (d == 1 or (C // d) % min_sublane == 0)]
    if c_split is not None:
        n_c = c_split if c_split in valid_splits else 1
    else:
        n_c = 2 if 2 in valid_splits else 1
        while B * (C // n_c) * LANE * itemsize > per_buf_cap:
            finer = [d for d in valid_splits if d > n_c]
            if not finer:
                break
            n_c = finer[0]
    c_tile = C // n_c

    # ---- spatial tiling: equalized tiles, no HBM pad, ragged tail masked ----
    S128 = _round_up(S, LANE)
    if s_tile is None:
        cap_lanes = per_buf_cap // max(1, B * c_tile * itemsize)
        s_tile = max(LANE, (cap_lanes // LANE) * LANE)
    else:
        s_tile = max(LANE, _round_up(s_tile, LANE))
    s_tile = min(S128, s_tile)
    n_s = _cdiv(S, s_tile)
    s_tile = min(S128, _round_up(_cdiv(S, n_s), LANE))   # equalize tile sizes
    n_chunks = s_tile // LANE
    need_mask = (n_s * s_tile != S)

    # ---- fused / lane-padded parameter slabs (few, dense DMAs) ----
    w1_blk = w1_t.reshape(n_c, c_tile, hidden)
    gb = jnp.concatenate([gamma.reshape(1, hidden),
                          beta.reshape(1, hidden)], axis=0)             # (2, hidden)

    w_heads = jnp.zeros((hidden, KH), jnp.float32)
    w_heads = w_heads.at[:, :KW].set(ws_t).at[:, KW_pad:KW_pad + KF].set(wf_t)

    bias = jnp.zeros((1, KH), jnp.float32)
    bias = (bias.at[:, :KW].set(bs.reshape(1, KW))
                .at[:, KW_pad:KW_pad + KF].set(bf.reshape(1, KF)))
    tb = jnp.zeros((1, KH), jnp.float32).at[:, :KW].set(temp_bias.reshape(1, KW))
    btb = jnp.concatenate([bias, tb], axis=0)                           # (2, KH)

    # Block-diagonal mixture-membership matrix M = G @ G^T, lane-padded.
    idx = jnp.arange(KW_pad)
    grp = idx // P
    valid = idx < KW
    M = ((grp[:, None] == grp[None, :])
         & valid[:, None] & valid[None, :]).astype(jnp.float32)         # (KW_pad, KW_pad)

    temp_arr = jnp.asarray([temp_value], dtype=jnp.float32)

    # ---- call 1: streamed, double-buffered spatial mean ----
    pool_kernel = functools.partial(
        _pool_sum_kernel, s_tile=s_tile, seq_len=S, inv_s=1.0 / S,
        need_mask=need_mask, n_chunks=n_chunks)

    pooled = pl.pallas_call(
        pool_kernel,
        out_shape=jax.ShapeDtypeStruct((n_c, B, c_tile), jnp.float32),
        grid_spec=pltpu.PrefetchScalarGridSpec(
            num_scalar_prefetch=0,
            grid=(n_c, n_s),
            in_specs=[pl.BlockSpec((B, c_tile, s_tile),
                                   lambda ci, si: (0, ci, si))],
            out_specs=pl.BlockSpec((None, B, c_tile),
                                   lambda ci, si: (ci, 0, 0)),
            scratch_shapes=[pltpu.VMEM((B, c_tile, LANE), jnp.float32)],
        ),
        compiler_params=pltpu.CompilerParams(
            # C blocks are independent -> "parallel" (uses both v7x TCs);
            # the spatial axis is the pooling reduction -> "arbitrary".
            dimension_semantics=("parallel", "arbitrary"),
            vmem_limit_bytes=vmem_limit,
        ),
    )(x3)

    # ---- call 2: tiny epilogue (full pooled tensor; BN couples the batch) ----
    epi_kernel = functools.partial(_epilogue_kernel, n_c=n_c, kw_pad=KW_pad)

    fused = pl.pallas_call(
        epi_kernel,
        out_shape=jax.ShapeDtypeStruct((B, KH), jnp.float32),
        grid_spec=pltpu.PrefetchScalarGridSpec(
            num_scalar_prefetch=0,
            grid=(1,),
            in_specs=[
                pl.BlockSpec((n_c, B, c_tile), lambda i: (0, 0, 0)),
                pl.BlockSpec((n_c, c_tile, hidden), lambda i: (0, 0, 0)),
                pl.BlockSpec((2, hidden), lambda i: (0, 0)),
                pl.BlockSpec((hidden, KH), lambda i: (0, 0)),
                pl.BlockSpec((2, KH), lambda i: (0, 0)),
                pl.BlockSpec((KW_pad, KW_pad), lambda i: (0, 0)),
                pl.BlockSpec(memory_space=pltpu.MemorySpace.SMEM),
            ],
            out_specs=pl.BlockSpec((B, KH), lambda i: (0, 0)),
        ),
        compiler_params=pltpu.CompilerParams(
            dimension_semantics=("arbitrary",),
            vmem_limit_bytes=vmem_limit,
        ),
    )(pooled, w1_blk, gb, w_heads, btb, M, temp_arr)

    # glue: strip lane padding, drop the last ("zero") column of every mixture
    attn = fused[:, :KW].reshape(B * L, P)[:, :-1]
    fourier = fused[:, KW_pad:KW_pad + KF]
    return attn, fourier


# --------------------------------------------------------------------------
# Pure-JAX reference (numerics oracle)
# --------------------------------------------------------------------------
def _reference(x, params, *, num_local_mixture, kw_planes_per_mixture,
               temp_value=0.0):
    B, C = x.shape[:2]
    L, P = num_local_mixture, kw_planes_per_mixture
    pooled = x.reshape(B, C, -1).mean(axis=-1)
    h = pooled @ params["w1_t"]
    mu = h.mean(0, keepdims=True)
    var = ((h - mu) ** 2).mean(0, keepdims=True)
    h = (h - mu) / jnp.sqrt(var + BN_EPS) * params["gamma"] + params["beta"]
    h = jnp.maximum(h, 0.0)
    fourier = h @ params["wf_t"] + params["bf"]
    s = h @ params["ws_t"] + params["bs"]
    r = s.reshape(B * L, P)
    r = r / (jnp.sum(jnp.abs(r), axis=1, keepdims=True) + 0.001)
    r = ((1.0 - temp_value) * r.reshape(B, -1)
         + temp_value * params["temp_bias"])
    return r.reshape(B * L, P)[:, :-1], fourier


if __name__ == "__main__":
    # Module hyper-parameters (small, consistent with __init__).
    in_planes = 16
    reduction = 0.25
    num_static_cell = 8
    num_local_mixture = 4
    num_fourier_basis = 2
    num_frequency_mixtures = 2

    hidden = max(int(in_planes * reduction), 16)                   # 16
    kw_planes_per_mixture = num_static_cell + 1                    # 9
    kw_planes = kw_planes_per_mixture * num_local_mixture          # 36
    kw_planes_fourier = in_planes * num_frequency_mixtures * (num_fourier_basis + 1)  # 96

    B = 2
    key = jax.random.PRNGKey(0)
    k_x, k_w1, k_wf, k_bf, k_ws, k_bs = jax.random.split(key, 6)

    # Deterministic, synthetic parameter init (shapes match the PyTorch module).
    params = {
        # fc1: Linear(in_planes, hidden, bias=False) -> weight transposed
        "w1_t": 0.1 * jax.random.normal(k_w1, (in_planes, hidden), jnp.float32),
        # BatchNorm1d(hidden): gamma=1, beta=0
        "gamma": jnp.ones((1, hidden), jnp.float32),
        "beta": jnp.zeros((1, hidden), jnp.float32),
        # fourier_head: Linear(hidden, kw_planes_fourier, bias=True)
        "wf_t": 0.1 * jax.random.normal(k_wf, (hidden, kw_planes_fourier), jnp.float32),
        "bf": 0.05 * jax.random.normal(k_bf, (1, kw_planes_fourier), jnp.float32),
        # spatial_head: Linear(hidden, kw_planes, bias=True)
        "ws_t": 0.1 * jax.random.normal(k_ws, (hidden, kw_planes), jnp.float32),
        "bs": 0.05 * jax.random.normal(k_bs, (1, kw_planes), jnp.float32),
        # temp_bias buffer (zeros)
        "temp_bias": jnp.zeros((1, kw_planes), jnp.float32),
    }

    def run_case(x_in, temp_value, s_tile, c_split, rtol, atol):
        attn, fourier = attention_forward(
            x_in, params,
            num_local_mixture=num_local_mixture,
            kw_planes_per_mixture=kw_planes_per_mixture,
            temp_value=temp_value, s_tile=s_tile, c_split=c_split)
        attn = jax.block_until_ready(attn)
        fourier = jax.block_until_ready(fourier)

        ref_attn, ref_fourier = _reference(
            x_in.astype(jnp.float32), params,
            num_local_mixture=num_local_mixture,
            kw_planes_per_mixture=kw_planes_per_mixture,
            temp_value=temp_value)

        assert attn.shape == (B * num_local_mixture, kw_planes_per_mixture - 1)
        assert fourier.shape == (B, kw_planes_fourier)
        assert jnp.allclose(attn, ref_attn, rtol=rtol, atol=atol)
        assert jnp.allclose(fourier, ref_fourier, rtol=rtol, atol=atol)

    # Case 1: multi-step spatial grid (S=256, s_tile=128), single C block, temp=0.
    x1 = jax.random.normal(k_x, (B, in_planes, 16, 16), jnp.float32)
    run_case(x1, 0.0, 128, 1, 1e-4, 1e-5)

    # Case 2: ragged spatial extent (S=225, not a multiple of 128) -> in-kernel
    # lane masking of the last block; two parallel C blocks; temp=0.25.
    x2 = jax.random.normal(jax.random.fold_in(k_x, 1),
                           (B, in_planes, 15, 15), jnp.float32)
    run_case(x2, 0.25, 128, None, 1e-4, 1e-5)

    # Case 3: bf16 activations, default (single max-size) tile, temp=0.25.
    run_case(x1.astype(jnp.bfloat16), 0.25, None, None, 1e-3, 1e-4)

    print("KERNEL_OK")
</pallas_src>

<mosaic_0001>
module attributes {stable_mosaic.version = 11 : i64} {
  func.func @_pool_sum_kernel(%arg0: i32, %arg1: i32, %arg2: memref<2x16x128xf32, #tpu.memory_space<vmem>>, %arg3: memref<1x2x16xf32, #tpu.memory_space<vmem>>, %arg4: memref<2x16x128xf32, #tpu.memory_space<vmem>>) attributes {dimension_semantics = [#tpu.dimension_semantics<parallel>, #tpu.dimension_semantics<arbitrary>], iteration_bounds = array<i64: 1, 2>, scalar_prefetch = 0 : i64, scratch_operands = 1 : i64, tpu.core_type = #tpu.core_type<tc>, window_params = [{transform_indices = @transform_0, window_bounds = array<i64: 2, 16, 128>}, {transform_indices = @transform_1, window_bounds = array<i64: 1, 2, 16>}]} {
    %c0_i32 = arith.constant 0 : i32
    %0 = arith.cmpi eq, %arg1, %c0_i32 : i32
    %1 = arith.extui %0 : i1 to i32
    %c0_i32_0 = arith.constant 0 : i32
    %2 = arith.cmpi ne, %1, %c0_i32_0 : i32
    scf.if %2 {
      %cst = arith.constant 0.000000e+00 : f32
      %10 = vector.broadcast %cst : f32 to vector<2x16x128xf32>
      %c0_10 = arith.constant 0 : index
      %c0_11 = arith.constant 0 : index
      %c0_12 = arith.constant 0 : index
      %11 = vector.load %arg4[%c0_10, %c0_11, %c0_12] : memref<2x16x128xf32, #tpu.memory_space<vmem>>, vector<2x16x128xf32>
      tpu.vector_store %arg4[%c0_10, %c0_11, %c0_12], %10 {strides = array<i32>} : memref<2x16x128xf32, #tpu.memory_space<vmem>>, vector<2x16x128xf32>,
    } else {
    }
    %c0 = arith.constant 0 : index
    %c0_1 = arith.constant 0 : index
    %c0_2 = arith.constant 0 : index
    %3 = vector.load %arg2[%c0, %c0_1, %c0_2] : memref<2x16x128xf32, #tpu.memory_space<vmem>>, vector<2x16x128xf32>
    %c0_3 = arith.constant 0 : index
    %c0_4 = arith.constant 0 : index
    %c0_5 = arith.constant 0 : index
    %4 = vector.load %arg4[%c0_3, %c0_4, %c0_5] : memref<2x16x128xf32, #tpu.memory_space<vmem>>, vector<2x16x128xf32>
    %5 = arith.addf %4, %3 : vector<2x16x128xf32>
    %c0_6 = arith.constant 0 : index
    %c0_7 = arith.constant 0 : index
    %c0_8 = arith.constant 0 : index
    %6 = vector.load %arg4[%c0_6, %c0_7, %c0_8] : memref<2x16x128xf32, #tpu.memory_space<vmem>>, vector<2x16x128xf32>
    tpu.vector_store %arg4[%c0_6, %c0_7, %c0_8], %5 {strides = array<i32>} : memref<2x16x128xf32, #tpu.memory_space<vmem>>, vector<2x16x128xf32>,
    %c1_i32 = arith.constant 1 : i32
    %7 = arith.cmpi eq, %arg1, %c1_i32 : i32
    %8 = arith.extui %7 : i1 to i32
    %c0_i32_9 = arith.constant 0 : i32
    %9 = arith.cmpi ne, %8, %c0_i32_9 : i32
    scf.if %9 {
      %c0_10 = arith.constant 0 : index
      %c0_11 = arith.constant 0 : index
      %c0_12 = arith.constant 0 : index
      %10 = vector.load %arg4[%c0_10, %c0_11, %c0_12] : memref<2x16x128xf32, #tpu.memory_space<vmem>>, vector<2x16x128xf32>
      %cst = arith.constant dense<0.000000e+00> : vector<2x16xf32>
      %11 = vector.multi_reduction <add>, %10, %cst [2] : vector<2x16x128xf32> to vector<2x16xf32>
      %cst_13 = arith.constant 3.906250e-03 : f32
      %12 = vector.broadcast %cst_13 : f32 to vector<2x16xf32>
      %13 = arith.mulf %11, %12 : vector<2x16xf32>
      %c0_14 = arith.constant 0 : index
      %c0_15 = arith.constant 0 : index
      %c0_16 = arith.constant 0 : index
      %14 = vector.load %arg3[%c0_14, %c0_15, %c0_16] : memref<1x2x16xf32, #tpu.memory_space<vmem>>, vector<1x2x16xf32>
      %15 = vector.shape_cast %14 : vector<1x2x16xf32> to vector<2x16xf32>
      %16 = vector.shape_cast %13 : vector<2x16xf32> to vector<1x2x16xf32>
      tpu.vector_store %arg3[%c0_14, %c0_15, %c0_16], %16 {strides = array<i32>} : memref<1x2x16xf32, #tpu.memory_space<vmem>>, vector<1x2x16xf32>,
    } else {
    }
    return
  }
  func.func @transform_0(%arg0: i32, %arg1: i32) -> (i32, i32, i32) {
    %c0_i32 = arith.constant 0 : i32
    %c0_i32_0 = arith.constant 0 : i32
    return %c0_i32, %arg0, %arg1 : i32, i32, i32
  }
  func.func @transform_1(%arg0: i32, %arg1: i32) -> (i32, i32, i32) {
    %c0_i32 = arith.constant 0 : i32
    %c0_i32_0 = arith.constant 0 : i32
    %c0_i32_1 = arith.constant 0 : i32
    return %arg0, %c0_i32, %c0_i32_0 : i32, i32, i32
  }
}

</mosaic_0001>

<llo_original>
// kernel: tpu_custom_call.1
$region0: #{tpu_custom_call.1}
  #allocation0 [shape = 'u32[]', space=smem, size = 0x4, offset = 0x4, fixed_abs, tag = 'smem constant byte address 0x4 - core index']
  #allocation1 [shape = 'u32[72,128]{1,0:T(1,128)}', space=vmem, size = 0x9000, scoped, tag = 'internal scratch']
  #allocation2 [shape = 'f32[2,16,128]{2,1,0:T(8,128)}', space=vmem, size = 0x4000, scoped, tag = 'scratch operand']
  %s0 = inlined_call_operand.hbm [shape: f32[2,16,256], index: 0, kind: input, shape index: {}]
  %s1 = inlined_call_operand.hbm [shape: f32[1,2,16], index: 1, kind: output, shape index: {}]
  %s2 = sld [smem:[#allocation0]]
  $region49: #{tpu_custom_call.1} parent=0
    _
  %s4 = ssub.s32 1, %s2
  %s5 = scalar_select 0, %s4, %s2
  $region1: #{tpu_custom_call.1} parent=0
    #allocation3 [shape = 'u8[32768]{0}', space=vmem, size = 0x8000, scoped, tag = 'input window, operand 0']
    #allocation4 [shape = 's32[2]{0}', space=sflag, size = 0x8, scoped, tag = 'scoped memory for tpu_custom_call.1']
    #allocation5 [shape = 's32[2]{0}', space=sflag, size = 0x8, scoped, tag = 'scoped memory for tpu_custom_call.1']
    #allocation6 [shape = 'u8[1024]{0}', space=vmem, size = 0x400, scoped, tag = 'output window, operand 0, single buffered']
    %6 = vsyncpa [#allocation4], 0
    %s7 = scalar_lea.sflag [#allocation4], 1
    %8 = vsyncpa %s7, 0
    %9 = vsyncpa [#allocation5], 0
    loop: start=0, step=1, limit=4
    $region2: #{tpu_custom_call.1} parent=1 // loop_pre_header
      _
    $region3: #{tpu_custom_call.1} parent=1 // loop_header
      %s11 = sphi 0, %s15
      %p12 = scmp.ge.s32.totalorder %s11, 4
      %s18 = sphi 0, %s30
      %s19 = sphi 0, %s26
      %s20 = sphi 0, %s18
      %s21 = sphi 0, %s19
      %s22 = sphi 0, %s20
      %s23 = sphi 0, %s21
      %s35 = sphi 0, %s37
      %s38 = sphi 0, %s35
      %s39 = sphi 0, %s38
      %s55 = sphi 0, %s39
      %s61 = sphi 0, %s63
      %s64 = sphi 0, %s61
      %s65 = sphi 0, %s64
      %s81 = sphi 0, %s65
    $region4: #{tpu_custom_call.1} parent=1 // loop_header_branch
      %14 = sbr.rel (%p12) target = $region8
    $region5: #{tpu_custom_call.1} parent=1 // loop_body
      %s16 = ssub.s32 %s11, 1
      %s17 = ssub.s32 %s11, 2
      %s24 = sadd.s32 1, %s19
      %p25 = scmp.ge.s32.totalorder %s24, 2
      %s26 = scalar_select %p25, 0, %s24
      %s27 = sadd.s32 1, %s18
      %s28 = scalar_select %p25, %s27, %s18
      %p29 = scmp.ge.s32.totalorder %s28, 1
      %s30 = scalar_select %p29, 0, %s28
      %s31 = ssub.s32 %s18, %s30
      %s32 = ssub.s32 %s19, %s26
      %s33 = sor.u32 %s31, %s32
      %p34 = scmp.eq.s32.totalorder %s33, 0
      %s36 = sadd.s32 %s35, 1
      %s37 = scalar_select %p34, %s35, %s36
      %p40 = pneg %p34
      %p41 = scmp.eq.s32.totalorder %s11, 1
      %p42 = por %p40, %p41
      %p43 = scmp.ne.s32.totalorder %s35, %s38
      %p44 = scmp.eq.s32.totalorder %s11, 0
      %p45 = por %p43, %p44
      %p46 = scmp.ne.s32.totalorder %s35, %s38
      %p47 = scmp.eq.s32.totalorder %s16, 1
      %p48 = por %p46, %p47
      %p49 = scmp.ne.s32.totalorder %s38, %s39
      %p50 = scmp.eq.s32.totalorder %s16, 0
      %p51 = por %p49, %p50
      %p52 = scmp.ne.s32.totalorder %s38, %s39
      %p53 = scmp.eq.s32.totalorder %s17, 1
      %p54 = por %p52, %p53
      %p56 = scmp.ne.s32.totalorder %s39, %s55
      %p57 = scmp.eq.s32.totalorder %s17, 0
      %p58 = por %p56, %p57
      %s59 = ssub.s32 %s18, %s30
      %p60 = scmp.eq.s32.totalorder %s59, 0
      %s62 = sadd.s32 %s61, 1
      %s63 = scalar_select %p60, %s61, %s62
      %p66 = pneg %p60
      %p67 = scmp.eq.s32.totalorder %s11, 1
      %p68 = por %p66, %p67
      %p69 = scmp.ne.s32.totalorder %s61, %s64
      %p70 = scmp.eq.s32.totalorder %s11, 0
      %p71 = por %p69, %p70
      %p72 = scmp.ne.s32.totalorder %s61, %s64
      %p73 = scmp.eq.s32.totalorder %s16, 1
      %p74 = por %p72, %p73
      %p75 = scmp.ne.s32.totalorder %s64, %s65
      %p76 = scmp.eq.s32.totalorder %s16, 0
      %p77 = por %p75, %p76
      %p78 = scmp.ne.s32.totalorder %s64, %s65
      %p79 = scmp.eq.s32.totalorder %s17, 1
      %p80 = por %p78, %p79
      %p82 = scmp.ne.s32.totalorder %s65, %s81
      %p83 = scmp.eq.s32.totalorder %s17, 0
      %p84 = por %p82, %p83
      %p85 = scmp.le.s32.totalorder 1, %s11
      %p86 = scmp.lt.s32.totalorder %s11, 3
      %p87 = pnand %p85, %p86
      %p88 = pneg %p87
      // Predicated region
      $region9: #{tpu_custom_call.1} parent=5 // pred_check
        _
      $region10: #{tpu_custom_call.1} parent=5 // pred_check_branch
        %90 = sbr.rel (%p87) target = $region12
      $region11: #{tpu_custom_call.1} parent=5 // pred_region
        %s91 = ssub.s32 %s11, 1
      $region12: #{tpu_custom_call.1} parent=5 // pred_fallthru
        _
      %p92 = scmp.lt.s32.totalorder %s11, 2
      // Predicated region
      $region13: #{tpu_custom_call.1} parent=5 // pred_check
        %p93 = pneg %p92
      $region14: #{tpu_custom_call.1} parent=5 // pred_check_branch
        %95 = sbr.rel (%p93) target = $region16
      $region15: #{tpu_custom_call.1} parent=5 // pred_region
        // Predicated region
        $region17: #{tpu_custom_call.1} parent=15 // pred_check
          %p96 = pneg %p45
        $region18: #{tpu_custom_call.1} parent=15 // pred_check_branch
          %98 = sbr.rel (%p96) target = $region20
        $region19: #{tpu_custom_call.1} parent=15 // pred_region
          %s99 = sand.u32 %s35, 1
          %s100 = scalar_lea.sflag [#allocation4], %s99
          %s101 = sand.u32 %s35, 1
          %s102 = smul.addr %s101, 32
          %s103 = scalar_lea.vmem [#allocation3], %s102
          %s104 = smul.u32 2, %s18
          %106 = vsyncadd %s100, 0
          %s107 = smul.addr %s104, 2
          %s108 = sadd.s32 %s19, %s107
          %s109 = smul.addr %s108, 8
          %s110 = scalar_lea.hbm %s0, %s109
          %s111 = sshll.u32 %s110, 4
          %s112 = int_to_ptr.hbm [resolvable:$true] %s111
          %s113 = sshll.u32 %s103, 4
          %s114 = int_to_ptr.vmem [resolvable:$true] %s113
          %119 = dma.hbm_to_vmem [thread:$0]  %s112, 512, %s114, %s100, 256, 128, 8
        $region20: #{tpu_custom_call.1} parent=15 // pred_fallthru
          _
      $region16: #{tpu_custom_call.1} parent=5 // pred_fallthru
        _
      %p120 = scmp.le.s32.totalorder 1, %s11
      %p121 = scmp.lt.s32.totalorder %s11, 3
      %p122 = pnand %p120, %p121
      %p123 = pneg %p122
      // Predicated region
      $region21: #{tpu_custom_call.1} parent=5 // pred_check
        _
      $region22: #{tpu_custom_call.1} parent=5 // pred_check_branch
        %125 = sbr.rel (%p122) target = $region24
      $region23: #{tpu_custom_call.1} parent=5 // pred_region
        %s126 = ssub.s32 %s11, 1
        %s127 = sand.u32 %s38, 1
        %s128 = scalar_lea.sflag [#allocation4], %s127
        %s129 = sand.u32 %s38, 1
        %s130 = smul.addr %s129, 32
        %s131 = scalar_lea.vmem [#allocation3], %s130
        // Predicated region
        $region25: #{tpu_custom_call.1} parent=23 // pred_check
          %p132 = pneg %p51
        $region26: #{tpu_custom_call.1} parent=23 // pred_check_branch
          %134 = sbr.rel (%p132) target = $region28
        $region27: #{tpu_custom_call.1} parent=23 // pred_region
          %136 = dma.done %s128, 512
        $region28: #{tpu_custom_call.1} parent=23 // pred_fallthru
          _
        %s137 = sand.u32 %s38, 1
        %s138 = scalar_lea.sflag [#allocation4], %s137
        %s139 = sand.u32 %s38, 1
        %s140 = smul.addr %s139, 32
        %s141 = scalar_lea.vmem [#allocation3], %s140
        %p142 = pneg %p51
        %p143 = pneg %p48
        %p144 = pneg %p77
        %p145 = pneg %p74
        %s146 = smul.u32 2, %s20
        %p147 = scmp.eq.s32.totalorder %s21, 0
        // Predicated region
        $region29: #{tpu_custom_call.1} parent=23 // pred_check
          %p148 = pneg %p147
        $region30: #{tpu_custom_call.1} parent=23 // pred_check_branch
          %150 = sbr.rel (%p148) target = $region32
        $region31: #{tpu_custom_call.1} parent=23 // pred_region
          %151 = vst [vmem:[#allocation2] sm:$0xff] 0.0
          %152 = vst [vmem:[#allocation2 + $0x8] sm:$0xff] 0.0
          %153 = vst [vmem:[#allocation2 + $0x10] sm:$0xff] 0.0
          %154 = vst [vmem:[#allocation2 + $0x18] sm:$0xff] 0.0
        $region32: #{tpu_custom_call.1} parent=23 // pred_fallthru
          _
        %v155 = vld [vmem:[%s131] sm:$0xff]
        %v156 = vld [vmem:[%s131 + $0x8] sm:$0xff]
        %v157 = vld [vmem:[%s131 + $0x10] sm:$0xff]
        %v158 = vld [vmem:[%s131 + $0x18] sm:$0xff]
        %v159 = vld [vmem:[#allocation2] sm:$0xff]
        %v160 = vld [vmem:[#allocation2 + $0x8] sm:$0xff]
        %v161 = vld [vmem:[#allocation2 + $0x10] sm:$0xff]
        %v162 = vld [vmem:[#allocation2 + $0x18] sm:$0xff]
        %v163 = vadd.f32 %v159, %v155
        %v164 = vadd.f32 %v160, %v156
        %v165 = vadd.f32 %v161, %v157
        %v166 = vadd.f32 %v162, %v158
        %167 = vst [vmem:[#allocation2] sm:$0xff] %v163
        %168 = vst [vmem:[#allocation2 + $0x8] sm:$0xff] %v164
        %169 = vst [vmem:[#allocation2 + $0x10] sm:$0xff] %v165
        %170 = vst [vmem:[#allocation2 + $0x18] sm:$0xff] %v166
        %p171 = scmp.eq.s32.totalorder %s21, 1
        // Predicated region
        $region33: #{tpu_custom_call.1} parent=23 // pred_check
          %p172 = pneg %p171
        $region34: #{tpu_custom_call.1} parent=23 // pred_check_branch
          %174 = sbr.rel (%p172) target = $region36
        $region35: #{tpu_custom_call.1} parent=23 // pred_region
          %v175 = vld [vmem:[#allocation2] sm:$0xff]
          %v176 = vld [vmem:[#allocation2 + $0x8] sm:$0xff]
          %v177 = vld [vmem:[#allocation2 + $0x10] sm:$0xff]
          %v178 = vld [vmem:[#allocation2 + $0x18] sm:$0xff]
          %179 = vadd.xlane.f32.xlu0 %v175
          %v180 = vpop.xlane.xlu0 %179
          %181 = vadd.xlane.f32.xlu0 %v176
          %v182 = vpop.xlane.xlu0 %181
          %183 = vadd.xlane.f32.xlu0 %v177
          %v184 = vpop.xlane.xlu0 %183
          %185 = vadd.xlane.f32.xlu0 %v178
          %v186 = vpop.xlane.xlu0 %185
          %v187 = vmul.f32 %v180, 0.00390625
          %v188 = vmul.f32 %v182, 0.00390625
          %v189 = vmul.f32 %v184, 0.00390625
          %v190 = vmul.f32 %v186, 0.00390625
          %v195 = vlaneseq
          %v196 = vand.u32 %v195, 127
          %v197 = vperm.slane %v187, %v196
          %v198 = vadd.s32 %v196, 4294967288
          %v199 = vperm.slane %v188, %v198
          %vm200 = vcmask 130112
          %v201 = vsel %vm200, %v199, %v197
          %v202 = vperm.slane %v189, %v196
          %v203 = vperm.slane %v190, %v198
          %v204 = vsel %vm200, %v203, %v202
          %vm205 = vcmask 1041409
          %v206 = vsel %vm205, %v204, %v201
          %vm208 = vcmask 123904
          %209 = vst.msk [vmem:[#allocation6] sm:$0x3] %vm208, %v206
        $region36: #{tpu_custom_call.1} parent=23 // pred_fallthru
          _
        // Predicated region
        $region37: #{tpu_custom_call.1} parent=23 // pred_check
          %p210 = pneg %p74
        $region38: #{tpu_custom_call.1} parent=23 // pred_check_branch
          %212 = sbr.rel (%p210) target = $region40
        $region39: #{tpu_custom_call.1} parent=23 // pred_region
          %214 = vsyncadd [#allocation5], 0
          %s215 = smul.addr %s20, 2
          %s216 = scalar_lea.hbm %s1, %s215
          %s218 = sshll.u32 [#allocation6], 4
          %s219 = int_to_ptr.vmem [resolvable:$true] %s218
          %s220 = sshll.u32 %s216, 4
          %s221 = int_to_ptr.hbm [resolvable:$true] %s220
          %223 = dma.vmem_to_hbm [thread:$0]  %s219, 32, %s221, [#allocation5]
        $region40: #{tpu_custom_call.1} parent=23 // pred_fallthru
          _
        // Predicated region
        $region41: #{tpu_custom_call.1} parent=23 // pred_check
          %p224 = pneg %p74
        $region42: #{tpu_custom_call.1} parent=23 // pred_check_branch
          %226 = sbr.rel (%p224) target = $region44
        $region43: #{tpu_custom_call.1} parent=23 // pred_region
          %228 = dma.done [#allocation5], 32
        $region44: #{tpu_custom_call.1} parent=23 // pred_fallthru
          _
      $region24: #{tpu_custom_call.1} parent=5 // pred_fallthru
        _
      %p229 = scmp.le.s32.totalorder 2, %s11
      // Predicated region
      $region45: #{tpu_custom_call.1} parent=5 // pred_check
        %p230 = pneg %p229
      $region46: #{tpu_custom_call.1} parent=5 // pred_check_branch
        %232 = sbr.rel (%p230) target = $region48
      $region47: #{tpu_custom_call.1} parent=5 // pred_region
        %s233 = ssub.s32 %s11, 2
      $region48: #{tpu_custom_call.1} parent=5 // pred_fallthru
        _
    $region6: #{tpu_custom_call.1} parent=1 // loop_footer
      %s15 = sadd.s32 1, %s11
    $region7: #{tpu_custom_call.1} parent=1 // loop_footer_branch
      %10 = sbr.rel target = $region3
    $region8: #{tpu_custom_call.1} parent=1 // loop_exit
      _
    %234 = vsyncpa [#allocation4], 1
    %s235 = scalar_lea.sflag [#allocation4], 1
    %236 = vsyncpa %s235, 1
    %237 = vsyncpa [#allocation5], 1
    %s238 = scalar_lea.sflag [#allocation5], 1
    %239 = vsyncpa %s238, 1

</llo_original>
